<compile_context>
chip_gen: v7x
topology: tpu7x:2x2x1
jax: 0.10.0
libtpu: 0.0.40
codegen_flags: <defaults>
</compile_context>

<pallas_src>
import functools

import jax
import jax.numpy as jnp
from jax import lax
from jax.experimental import pallas as pl
from jax.experimental.pallas import tpu as pltpu

FC_MID = 16  # hidden width of the MLP (fixed by the module)


def _round_up(x, m):
    return (x + m - 1) // m * m


def _gelu_exact(x):
    # nn.GELU() default is the exact erf-based GELU.
    return 0.5 * x * (1.0 + lax.erf(x * jnp.float32(0.7071067811865476)))


def mlp_kernel(x_ref, w1_ref, w2_ref, o_ref):
    # x_ref : (tile_n, D_in)   f32
    # w1_ref: (D_in, FC_MID)   f32   (fc1.weight.T)
    # w2_ref: (FC_MID, D_out)  f32   (fc2.weight.T)
    # o_ref : (tile_n, D_out)  f32
    t = jnp.dot(x_ref[...], w1_ref[...], preferred_element_type=jnp.float32)
    t = _gelu_exact(t)
    o_ref[...] = jnp.dot(t, w2_ref[...],
                         preferred_element_type=jnp.float32).astype(o_ref.dtype)


@functools.partial(jax.jit, static_argnames=("tile_n",))
def mlp_forward(x, w1_t, w2_t, tile_n=256):
    """x: (..., D_in) f32.  w1_t: (D_in, 16) = fc1.weight.T.
    w2_t: (16, D_out) = fc2.weight.T.  Returns (..., D_out) f32."""
    d_in = x.shape[-1]
    d_out = w2_t.shape[-1]
    lead = x.shape[:-1]
    n = 1
    for s in lead:
        n *= s

    x_flat = x.reshape(n, d_in).astype(jnp.float32)
    tile = min(tile_n, _round_up(n, 8))          # small inputs: one tiny tile
    n_pad = _round_up(n, tile)                   # pad ragged N (trimmed below)
    x_flat = jnp.pad(x_flat, ((0, n_pad - n), (0, 0)))

    out = pl.pallas_call(
        mlp_kernel,
        out_shape=jax.ShapeDtypeStruct((n_pad, d_out), jnp.float32),
        grid_spec=pltpu.PrefetchScalarGridSpec(
            num_scalar_prefetch=0,
            grid=(n_pad // tile,),
            in_specs=[
                pl.BlockSpec((tile, d_in), lambda i: (i, 0)),
                pl.BlockSpec((d_in, FC_MID), lambda i: (0, 0)),
                pl.BlockSpec((FC_MID, d_out), lambda i: (0, 0)),
            ],
            out_specs=pl.BlockSpec((tile, d_out), lambda i: (i, 0)),
        ),
        compiler_params=pltpu.CompilerParams(
            dimension_semantics=("parallel",)),
    )(x_flat, w1_t, w2_t)

    return out[:n].reshape(*lead, d_out)


def make_params(features_in, features_out, value):
    # Matches the torch module: fc1.weight.data.fill_(value) with shape
    # (16, features_in); fc2.weight.data.fill_(value * 2) with shape
    # (features_out, 16).  We pre-transpose for row-major matmuls.
    w1_t = jnp.full((features_in, FC_MID), float(value), dtype=jnp.float32)
    w2_t = jnp.full((FC_MID, features_out), float(2 * value), dtype=jnp.float32)
    return w1_t, w2_t


def reference(x, w1_t, w2_t):
    t = x @ w1_t
    t = jax.nn.gelu(t, approximate=False)
    return t @ w2_t


if __name__ == "__main__":
    D_IN, D_OUT, VALUE = 64, 64, 0.5
    w1_t, w2_t = make_params(D_IN, D_OUT, VALUE)

    # Small shape consistent with the module's test setup (batch=2, seq=8).
    B, S = 2, 8
    x = jax.random.normal(jax.random.PRNGKey(0), (B, S, D_IN),
                          dtype=jnp.float32)
    out = jax.block_until_ready(mlp_forward(x, w1_t, w2_t))
    ref = reference(x, w1_t, w2_t)
    assert out.shape == (B, S, D_OUT), out.shape
    assert jnp.allclose(out, ref, atol=1e-4, rtol=1e-5), "mismatch (small)"

    # Second run exercising multi-tile grid + ragged-N padding path.
    B2, S2 = 3, 100  # N=300 -> padded to 512, grid=(2,)
    x2 = jax.random.normal(jax.random.PRNGKey(1), (B2, S2, D_IN),
                           dtype=jnp.float32)
    out2 = jax.block_until_ready(mlp_forward(x2, w1_t, w2_t))
    ref2 = reference(x2, w1_t, w2_t)
    assert out2.shape == (B2, S2, D_OUT), out2.shape
    assert jnp.allclose(out2, ref2, atol=1e-4, rtol=1e-5), "mismatch (tiled)"

    print("KERNEL_OK")
</pallas_src>

<mosaic_0001>
module attributes {stable_mosaic.version = 11 : i64} {
  func.func @mlp_kernel(%arg0: i32, %arg1: memref<16x64xf32, #tpu.memory_space<vmem>>, %arg2: memref<64x16xf32, #tpu.memory_space<vmem>>, %arg3: memref<16x64xf32, #tpu.memory_space<vmem>>, %arg4: memref<16x64xf32, #tpu.memory_space<vmem>>) attributes {dimension_semantics = [#tpu.dimension_semantics<parallel>], iteration_bounds = array<i64: 1>, scalar_prefetch = 0 : i64, scratch_operands = 0 : i64, tpu.core_type = #tpu.core_type<tc>, window_params = [{transform_indices = @transform_0, window_bounds = array<i64: 16, 64>}, {pipeline_mode = #tpu.pipeline_mode<synchronous>, transform_indices = @transform_1, window_bounds = array<i64: 64, 16>}, {pipeline_mode = #tpu.pipeline_mode<synchronous>, transform_indices = @transform_2, window_bounds = array<i64: 16, 64>}, {transform_indices = @transform_3, window_bounds = array<i64: 16, 64>}]} {
    %c0 = arith.constant 0 : index
    %c0_0 = arith.constant 0 : index
    %0 = vector.load %arg1[%c0, %c0_0] : memref<16x64xf32, #tpu.memory_space<vmem>>, vector<16x64xf32>
    %c0_1 = arith.constant 0 : index
    %c0_2 = arith.constant 0 : index
    %1 = vector.load %arg2[%c0_1, %c0_2] : memref<64x16xf32, #tpu.memory_space<vmem>>, vector<64x16xf32>
    %cst = arith.constant dense<0.000000e+00> : vector<16x16xf32>
    %2 = tpu.matmul %0, %1, %cst {dimension_numbers = #tpu.dot_dimension_numbers<[1], [0], [0], [1], [0, 0, 1, 1], [], []>} : vector<16x64xf32>, vector<64x16xf32>, vector<16x16xf32> -> vector<16x16xf32>
    %cst_3 = arith.constant 5.000000e-01 : f32
    %3 = vector.broadcast %cst_3 : f32 to vector<16x16xf32>
    %4 = arith.mulf %3, %2 : vector<16x16xf32>
    %cst_4 = arith.constant 0.707106769 : f32
    %5 = vector.broadcast %cst_4 : f32 to vector<16x16xf32>
    %6 = arith.mulf %2, %5 : vector<16x16xf32>
    %7 = math.erf %6 : vector<16x16xf32>
    %cst_5 = arith.constant 1.000000e+00 : f32
    %8 = vector.broadcast %cst_5 : f32 to vector<16x16xf32>
    %9 = arith.addf %8, %7 : vector<16x16xf32>
    %10 = arith.mulf %4, %9 : vector<16x16xf32>
    %c0_6 = arith.constant 0 : index
    %c0_7 = arith.constant 0 : index
    %11 = vector.load %arg3[%c0_6, %c0_7] : memref<16x64xf32, #tpu.memory_space<vmem>>, vector<16x64xf32>
    %cst_8 = arith.constant dense<0.000000e+00> : vector<16x64xf32>
    %12 = tpu.matmul %10, %11, %cst_8 {dimension_numbers = #tpu.dot_dimension_numbers<[1], [0], [0], [1], [0, 0, 1, 1], [], []>} : vector<16x16xf32>, vector<16x64xf32>, vector<16x64xf32> -> vector<16x64xf32>
    %c0_9 = arith.constant 0 : index
    %c0_10 = arith.constant 0 : index
    %13 = vector.load %arg4[%c0_9, %c0_10] : memref<16x64xf32, #tpu.memory_space<vmem>>, vector<16x64xf32>
    tpu.vector_store %arg4[%c0_9, %c0_10], %12 {strides = array<i32>} : memref<16x64xf32, #tpu.memory_space<vmem>>, vector<16x64xf32>,
    return
  }
  func.func @transform_0(%arg0: i32) -> (i32, i32) {
    %c0_i32 = arith.constant 0 : i32
    %c0_i32_0 = arith.constant 0 : i32
    return %arg0, %c0_i32 : i32, i32
  }
  func.func @transform_1(%arg0: i32) -> (i32, i32) {
    %c0_i32 = arith.constant 0 : i32
    %c0_i32_0 = arith.constant 0 : i32
    %c0_i32_1 = arith.constant 0 : i32
    return %c0_i32, %c0_i32_0 : i32, i32
  }
  func.func @transform_2(%arg0: i32) -> (i32, i32) {
    %c0_i32 = arith.constant 0 : i32
    %c0_i32_0 = arith.constant 0 : i32
    %c0_i32_1 = arith.constant 0 : i32
    return %c0_i32, %c0_i32_0 : i32, i32
  }
  func.func @transform_3(%arg0: i32) -> (i32, i32) {
    %c0_i32 = arith.constant 0 : i32
    %c0_i32_0 = arith.constant 0 : i32
    return %arg0, %c0_i32 : i32, i32
  }
}

</mosaic_0001>

<llo_original>
// kernel: mlp_forward.1
$region0: #{mlp_forward.1}
  #allocation0 [shape = 'u32[]', space=smem, size = 0x4, offset = 0x4, fixed_abs, tag = 'smem constant byte address 0x4 - core index']
  #allocation1 [shape = 'u32[144,128]{1,0:T(1,128)}', space=vmem, size = 0x12000, scoped, tag = 'internal scratch']
  %s0 = inlined_call_operand.vmem [shape: f32[16,64], index: 0, kind: input, shape index: {}]
  %s1 = inlined_call_operand.vmem [shape: f32[64,16], index: 1, kind: input, shape index: {}]
  %s2 = inlined_call_operand.vmem [shape: f32[16,64], index: 2, kind: input, shape index: {}]
  %s3 = inlined_call_operand.hbm [shape: f32[16,64], index: 3, kind: output, shape index: {}]
  %s4 = sld [smem:[#allocation0]]
  $region22: #{mlp_forward.1} parent=0
    _
  %s6 = ssub.s32 1, %s4
  %s7 = scalar_select 0, %s6, %s4
  $region1: #{mlp_forward.1} parent=0
    #allocation2 [shape = 'u8[8192]{0}', space=vmem, size = 0x2000, scoped, tag = 'output window, operand 0, single buffered']
    #allocation3 [shape = 's32[1]{0}', space=sflag, size = 0x4, scoped, tag = 'scoped memory for mlp_forward.1']
    %8 = vsyncpa [#allocation3], 0
    // Predicated region
    $region2: #{mlp_forward.1} parent=1 // pred_check
      _
    $region3: #{mlp_forward.1} parent=1 // pred_check_branch
      %10 = sbr.rel (0) target = $region5
    $region4: #{mlp_forward.1} parent=1 // pred_region
      _
    $region5: #{mlp_forward.1} parent=1 // pred_fallthru
      _
    // Predicated region
    $region6: #{mlp_forward.1} parent=1 // pred_check
      _
    $region7: #{mlp_forward.1} parent=1 // pred_check_branch
      %12 = sbr.rel (0) target = $region9
    $region8: #{mlp_forward.1} parent=1 // pred_region
      _
    $region9: #{mlp_forward.1} parent=1 // pred_fallthru
      _
    // Predicated region
    $region10: #{mlp_forward.1} parent=1 // pred_check
      _
    $region11: #{mlp_forward.1} parent=1 // pred_check_branch
      %14 = sbr.rel (0) target = $region13
    $region12: #{mlp_forward.1} parent=1 // pred_region
      _
    $region13: #{mlp_forward.1} parent=1 // pred_fallthru
      _
    %v15 = vld [vmem:[%s0] sm:$0xff]
    %v16 = vld [vmem:[%s0 + $0x8] sm:$0xff]
    %v17 = vld [vmem:[%s1] sm:$0xff]
    %v18 = vld [vmem:[%s1 + $0x8] sm:$0xff]
    %v19 = vld [vmem:[%s1 + $0x10] sm:$0xff]
    %v20 = vld [vmem:[%s1 + $0x18] sm:$0xff]
    %v21 = vld [vmem:[%s1 + $0x20] sm:$0xff]
    %v22 = vld [vmem:[%s1 + $0x28] sm:$0xff]
    %v23 = vld [vmem:[%s1 + $0x30] sm:$0xff]
    %v24 = vld [vmem:[%s1 + $0x38] sm:$0xff]
    %vm25 = vcmask 523264
    %v27 = vsel %vm25, %v15, 0
    %v30 = vsel %vm25, %v16, 0
    %32 = vmatprep.subr.mxu0 0.0
    %33 = vmatpush1.msra.mxu0 %v17
    %34 = vmatprep.subr.mxu0 0.0
    %35 = vmatpush1.msra.mxu0 %v18
    %36 = vmatprep.subr.mxu0 0.0
    %37 = vmatpush1.msra.mxu0 %v19
    %38 = vmatprep.subr.mxu0 0.0
    %39 = vmatpush1.msra.mxu0 %v20
    %40 = vmatprep.subr.mxu0 0.0
    %41 = vmatpush1.msra.mxu0 %v21
    %42 = vmatprep.subr.mxu0 0.0
    %43 = vmatpush1.msra.mxu0 %v22
    %44 = vmatprep.subr.mxu0 0.0
    %45 = vmatpush1.msra.mxu0 %v23
    %46 = vmatprep.subr.mxu0 0.0
    %47 = vmatpush1.msra.mxu0 %v24
    %48 = vmatprep.subr.mxu0 0.0
    %49 = vmatpush1.msra.mxu0 0.0
    %50 = vmatprep.subr.mxu0 0.0
    %51 = vmatpush1.msra.mxu0 0.0
    %52 = vmatprep.subr.mxu0 0.0
    %53 = vmatpush1.msra.mxu0 0.0
    %54 = vmatprep.subr.mxu0 0.0
    %55 = vmatpush1.msra.mxu0 0.0
    %56 = vmatprep.subr.mxu0 0.0
    %57 = vmatpush1.msra.mxu0 0.0
    %58 = vmatprep.subr.mxu0 0.0
    %59 = vmatpush1.msra.mxu0 0.0
    %60 = vmatprep.subr.mxu0 0.0
    %61 = vmatpush1.msra.mxu0 0.0
    %62 = vmatprep.subr.mxu0 0.0
    %63 = vmatpush1.msra.mxu0 0.0
    %64 = vmatprep.subr.mxu0 0.0
    %65 = vmatpush1.msra.mxu0 0.0
    %66 = vmatprep.subr.mxu0 0.0
    %67 = vmatpush1.msra.mxu0 0.0
    %68 = vmatprep.subr.mxu0 0.0
    %69 = vmatpush1.msra.mxu0 0.0
    %70 = vmatprep.subr.mxu0 0.0
    %71 = vmatpush1.msra.mxu0 0.0
    %72 = vmatprep.subr.mxu0 0.0
    %73 = vmatpush1.msra.mxu0 0.0
    %74 = vmatprep.subr.mxu0 0.0
    %75 = vmatpush1.msra.mxu0 0.0
    %76 = vmatprep.subr.mxu0 0.0
    %77 = vmatpush1.msra.mxu0 0.0
    %78 = vmatprep.subr.mxu0 0.0
    %79 = vmatpush1.msra.mxu0 0.0
    %80 = vmatprep.subr.mxu0 0.0
    %81 = vmatpush1.msra.mxu0 0.0
    %82 = vmatprep.subr.mxu0 0.0
    %83 = vmatpush1.msra.mxu0 0.0
    %84 = vmatprep.subr.mxu0 0.0
    %85 = vmatpush1.msra.mxu0 0.0
    %86 = vmatprep.subr.mxu0 0.0
    %87 = vmatpush1.msra.mxu0 0.0
    %88 = vmatprep.subr.mxu0 0.0
    %89 = vmatpush1.msra.mxu0 0.0
    %90 = vmatprep.subr.mxu0 0.0
    %91 = vmatpush1.msra.mxu0 0.0
    %92 = vmatprep.subr.mxu0 0.0
    %93 = vmatpush1.msra.mxu0 0.0
    %94 = vmatprep.subr.mxu0 0.0
    %95 = vmatpush1.msra.mxu0 0.0
    %96 = vmatprep.mubr.f32.mxu0 0.0
    %97 = vmatmul.mubr.f32.gmra.mrb[0].mxu0 %v27
    %v98 = vpop.f32.mrb[0].mxu0
    %v99 = vadd.f32 0.0, %v98
    %v100 = vpop.f32.mrb[0].mxu0
    %101 = vmatprep.mubr.f32.mxu0 0.0
    %102 = vmatmul.mubr.f32.gmra.mrb[0].mxu0 %v30
    %v103 = vpop.f32.mrb[0].mxu0
    %v104 = vadd.f32 0.0, %v103
    %v105 = vpop.f32.mrb[0].mxu0
    %106 = vdwg.mxu0
    %v107 = vmul.f32 %v99, 0.5
    %v108 = vmul.f32 %v104, 0.5
    %v109 = vmul.f32 %v99, 0.70710677
    %v110 = vmul.f32 %v104, 0.70710677
    %v111 = verf.f32.pop %v109
    %v112 = verf.f32.pop %v110
    %v113 = vadd.f32 %v111, 1.0
    %v114 = vadd.f32 %v112, 1.0
    %v115 = vmul.f32 %v107, %v113
    %v116 = vmul.f32 %v108, %v114
    %v117 = vld [vmem:[%s2] sm:$0xff]
    %v118 = vld [vmem:[%s2 + $0x8] sm:$0xff]
    %vm119 = vcmask 130048
    %v121 = vsel %vm119, %v115, 0
    %v124 = vsel %vm119, %v116, 0
    %126 = vmatprep.subr.mxu0 0.0
    %127 = vmatpush1.msra.mxu0 %v117
    %128 = vmatprep.subr.mxu0 0.0
    %129 = vmatpush1.msra.mxu0 %v118
    %130 = vmatprep.subr.mxu0 0.0
    %131 = vmatpush1.msra.mxu0 0.0
    %132 = vmatprep.subr.mxu0 0.0
    %133 = vmatpush1.msra.mxu0 0.0
    %134 = vmatprep.subr.mxu0 0.0
    %135 = vmatpush1.msra.mxu0 0.0
    %136 = vmatprep.subr.mxu0 0.0
    %137 = vmatpush1.msra.mxu0 0.0
    %138 = vmatprep.subr.mxu0 0.0
    %139 = vmatpush1.msra.mxu0 0.0
    %140 = vmatprep.subr.mxu0 0.0
    %141 = vmatpush1.msra.mxu0 0.0
    %142 = vmatprep.subr.mxu0 0.0
    %143 = vmatpush1.msra.mxu0 0.0
    %144 = vmatprep.subr.mxu0 0.0
    %145 = vmatpush1.msra.mxu0 0.0
    %146 = vmatprep.subr.mxu0 0.0
    %147 = vmatpush1.msra.mxu0 0.0
    %148 = vmatprep.subr.mxu0 0.0
    %149 = vmatpush1.msra.mxu0 0.0
    %150 = vmatprep.subr.mxu0 0.0
    %151 = vmatpush1.msra.mxu0 0.0
    %152 = vmatprep.subr.mxu0 0.0
    %153 = vmatpush1.msra.mxu0 0.0
    %154 = vmatprep.subr.mxu0 0.0
    %155 = vmatpush1.msra.mxu0 0.0
    %156 = vmatprep.subr.mxu0 0.0
    %157 = vmatpush1.msra.mxu0 0.0
    %158 = vmatprep.subr.mxu0 0.0
    %159 = vmatpush1.msra.mxu0 0.0
    %160 = vmatprep.subr.mxu0 0.0
    %161 = vmatpush1.msra.mxu0 0.0
    %162 = vmatprep.subr.mxu0 0.0
    %163 = vmatpush1.msra.mxu0 0.0
    %164 = vmatprep.subr.mxu0 0.0
    %165 = vmatpush1.msra.mxu0 0.0
    %166 = vmatprep.subr.mxu0 0.0
    %167 = vmatpush1.msra.mxu0 0.0
    %168 = vmatprep.subr.mxu0 0.0
    %169 = vmatpush1.msra.mxu0 0.0
    %170 = vmatprep.subr.mxu0 0.0
    %171 = vmatpush1.msra.mxu0 0.0
    %172 = vmatprep.subr.mxu0 0.0
    %173 = vmatpush1.msra.mxu0 0.0
    %174 = vmatprep.subr.mxu0 0.0
    %175 = vmatpush1.msra.mxu0 0.0
    %176 = vmatprep.subr.mxu0 0.0
    %177 = vmatpush1.msra.mxu0 0.0
    %178 = vmatprep.subr.mxu0 0.0
    %179 = vmatpush1.msra.mxu0 0.0
    %180 = vmatprep.subr.mxu0 0.0
    %181 = vmatpush1.msra.mxu0 0.0
    %182 = vmatprep.subr.mxu0 0.0
    %183 = vmatpush1.msra.mxu0 0.0
    %184 = vmatprep.subr.mxu0 0.0
    %185 = vmatpush1.msra.mxu0 0.0
    %186 = vmatprep.subr.mxu0 0.0
    %187 = vmatpush1.msra.mxu0 0.0
    %188 = vmatprep.subr.mxu0 0.0
    %189 = vmatpush1.msra.mxu0 0.0
    %190 = vmatprep.mubr.f32.mxu0 0.0
    %191 = vmatmul.mubr.f32.gmra.mrb[0].mxu0 %v121
    %v192 = vpop.f32.mrb[0].mxu0
    %v193 = vadd.f32 0.0, %v192
    %v194 = vpop.f32.mrb[0].mxu0
    %195 = vmatprep.mubr.f32.mxu0 0.0
    %196 = vmatmul.mubr.f32.gmra.mrb[0].mxu0 %v124
    %v197 = vpop.f32.mrb[0].mxu0
    %v198 = vadd.f32 0.0, %v197
    %v199 = vpop.f32.mrb[0].mxu0
    %200 = vdwg.mxu0
    %201 = vst.msk [vmem:[#allocation2] sm:$0xff] %vm25, %v193
    %202 = vst.msk [vmem:[#allocation2 + $0x8] sm:$0xff] %vm25, %v198
    // Predicated region
    $region14: #{mlp_forward.1} parent=1 // pred_check
      _
    $region15: #{mlp_forward.1} parent=1 // pred_check_branch
      %204 = sbr.rel (0) target = $region17
    $region16: #{mlp_forward.1} parent=1 // pred_region
      %s206 = ssub.s32 256, 256
      %207 = vsyncadd [#allocation3], %s206
      %s208 = sshll.u32 [#allocation2], 4
      %s209 = int_to_ptr.vmem [resolvable:$true] %s208
      %214 = dma.vmem_to_hbm [thread:$0]  %s209, 256, %s3, [#allocation3], 128, 128, 8
    $region17: #{mlp_forward.1} parent=1 // pred_fallthru
      _
    // Predicated region
    $region18: #{mlp_forward.1} parent=1 // pred_check
      _
    $region19: #{mlp_forward.1} parent=1 // pred_check_branch
      %216 = sbr.rel (0) target = $region21
    $region20: #{mlp_forward.1} parent=1 // pred_region
      %217 = dma.done [#allocation3], 256
    $region21: #{mlp_forward.1} parent=1 // pred_fallthru
      _
    %218 = vsyncpa [#allocation3], 1

</llo_original>
